<compile_context>
chip_gen: v7x
topology: tpu7x:2x2x1
jax: 0.10.0
libtpu: 0.0.40
codegen_flags: <defaults>
</compile_context>

<pallas_src>
import jax
import jax.numpy as jnp
from jax import lax
from jax.experimental import pallas as pl
from jax.experimental.pallas import tpu as pltpu

BN_EPS = 1e-5
LEAKY_SLOPE = 0.01  # PyTorch nn.LeakyReLU default


# --------------------------------------------------------------------------
# Hardware-aware sizing helpers
# --------------------------------------------------------------------------
def _vmem_capacity_bytes():
    """Physical VMEM per core; conservative (v7x-sized) fallback if unknown."""
    try:
        cap = int(pltpu.get_tpu_info().vmem_capacity_bytes)
        if cap > 0:
            return cap
    except Exception:
        pass
    return 64 * 1024 * 1024


def _pick_row_tile(R):
    """Row (sublane) tile: multiple of 8, <=256, >=2 blocks when possible."""
    if R <= 8 or (R % 8) != 0:
        # Full-dim block is always legal; covers tiny / odd N*C.
        # TODO(synk): for very large R not a multiple of 8, cdiv-tile rows too.
        return R
    rt = min(R, 256)
    if rt == R:
        # Split roughly in half so v7x's two TensorCores both get row blocks.
        rt = max(8, ((R // 2) // 8) * 8)
    return rt


def _pick_hw_tile(HW, r_tile, itemsize, max_block_bytes):
    """Lane tile: multiple of 128 (or full HW), capped by the block byte budget."""
    if HW <= 128:
        return HW
    cap_lanes = max(128, max_block_bytes // (itemsize * max(r_tile, 1)))
    t = (min(HW, cap_lanes) // 128) * 128
    return max(t, 128)


# --------------------------------------------------------------------------
# Kernels
# --------------------------------------------------------------------------
def _make_stats_kernel(hw_total, hw_tile, mask_edge):
    """Pass 1: per-row shifted sum / sum-of-squares, accumulated over HW tiles."""

    def kernel(x_ref, ref_ref, s1_ref, s2_ref):
        t = pl.program_id(1)

        @pl.when(t == 0)
        def _():
            s1_ref[...] = jnp.zeros_like(s1_ref)
            s2_ref[...] = jnp.zeros_like(s2_ref)

        x = x_ref[...].astype(jnp.float32)          # (r_tile, hw_tile)
        xc = x - ref_ref[...]                       # (r_tile, 1) broadcasts
        if mask_edge:
            lane = lax.broadcasted_iota(jnp.int32, x.shape, 1)
            valid = (t * hw_tile + lane) < hw_total
            xc = jnp.where(valid, xc, 0.0)          # padding never enters stats
        s1_ref[...] += jnp.sum(xc, axis=1, keepdims=True)
        s2_ref[...] += jnp.sum(xc * xc, axis=1, keepdims=True)

    return kernel


def _apply_kernel(x_ref, scale_ref, shift_ref, o_ref):
    """Pass 2: y = x * scale + shift, then LeakyReLU, streamed tile by tile."""
    x = x_ref[...].astype(jnp.float32)              # (r_tile, hw_tile)
    y = x * scale_ref[...] + shift_ref[...]         # (r_tile, 1) broadcasts
    o_ref[...] = jnp.maximum(y, LEAKY_SLOPE * y).astype(o_ref.dtype)


# --------------------------------------------------------------------------
# Wrapper
# --------------------------------------------------------------------------
def abn_forward(x_nchw, gamma, beta):
    """ABN forward. x_nchw: (N, C, H, W); gamma, beta: (C,)."""
    N, C, H, W = x_nchw.shape
    HW = H * W
    R = N * C
    L = N * HW

    # Free layout change: NCHW is contiguous as (N*C, H*W); no transpose.
    x2 = x_nchw.reshape(R, HW)

    itemsize = jnp.dtype(x_nchw.dtype).itemsize
    vmem_cap = _vmem_capacity_bytes()
    vmem_limit = min(int(0.75 * vmem_cap), 96 * 1024 * 1024)
    block_budget = 8 * 1024 * 1024 if vmem_cap > 64 * 1024 * 1024 else 4 * 1024 * 1024

    r_tile = _pick_row_tile(R)
    hw_tile = _pick_hw_tile(HW, r_tile, itemsize, block_budget)
    num_r = pl.cdiv(R, r_tile)
    num_t = pl.cdiv(HW, hw_tile)
    mask_edge = (HW % hw_tile) != 0

    # Per-channel reference for the shifted (numerically stable) sums:
    # ref_c = x[0, c, 0, 0]; each row (n, c) uses its channel's reference.
    ref_c = x2[:C, 0].astype(jnp.float32)                              # (C,)
    ref_rows = jnp.broadcast_to(ref_c[None, :], (N, C)).reshape(R, 1)  # (R, 1)

    # ---- Pass 1: per-row shifted partial sums ----------------------------
    stats_shape = jax.ShapeDtypeStruct((R, 1), jnp.float32)
    s1, s2 = pl.pallas_call(
        _make_stats_kernel(HW, hw_tile, mask_edge),
        out_shape=(stats_shape, stats_shape),
        grid_spec=pltpu.PrefetchScalarGridSpec(
            num_scalar_prefetch=0,
            grid=(num_r, num_t),
            in_specs=[
                pl.BlockSpec((r_tile, hw_tile), lambda r, t: (r, t)),
                pl.BlockSpec((r_tile, 1), lambda r, t: (r, 0)),
            ],
            out_specs=(
                pl.BlockSpec((r_tile, 1), lambda r, t: (r, 0)),
                pl.BlockSpec((r_tile, 1), lambda r, t: (r, 0)),
            ),
        ),
        compiler_params=pltpu.CompilerParams(
            dimension_semantics=("parallel", "arbitrary"),
            vmem_limit_bytes=vmem_limit,
        ),
    )(x2, ref_rows)

    # ---- Finalize per-channel scale/shift (tiny O(C) work) ---------------
    inv_l = jnp.float32(1.0 / L)
    s1_c = jnp.sum(s1.reshape(N, C), axis=0)      # sum over n of sum(x - ref_c)
    s2_c = jnp.sum(s2.reshape(N, C), axis=0)      # sum over n of sum((x - ref_c)^2)
    d = s1_c * inv_l                              # E[x] - ref_c
    mean = ref_c + d
    var = jnp.maximum(s2_c * inv_l - d * d, 0.0)  # biased var, stable (O(std^2) terms)
    inv_std = lax.rsqrt(var + jnp.float32(BN_EPS))
    scale_c = gamma.astype(jnp.float32) * inv_std            # (C,)
    shift_c = beta.astype(jnp.float32) - mean * scale_c      # (C,)
    scale_rows = jnp.broadcast_to(scale_c[None, :], (N, C)).reshape(R, 1)
    shift_rows = jnp.broadcast_to(shift_c[None, :], (N, C)).reshape(R, 1)

    # ---- Pass 2: normalize + LeakyReLU, fully parallel streaming ---------
    out2 = pl.pallas_call(
        _apply_kernel,
        out_shape=jax.ShapeDtypeStruct((R, HW), x_nchw.dtype),
        grid_spec=pltpu.PrefetchScalarGridSpec(
            num_scalar_prefetch=0,
            grid=(num_r, num_t),
            in_specs=[
                pl.BlockSpec((r_tile, hw_tile), lambda r, t: (r, t)),
                pl.BlockSpec((r_tile, 1), lambda r, t: (r, 0)),
                pl.BlockSpec((r_tile, 1), lambda r, t: (r, 0)),
            ],
            out_specs=pl.BlockSpec((r_tile, hw_tile), lambda r, t: (r, t)),
        ),
        compiler_params=pltpu.CompilerParams(
            dimension_semantics=("parallel", "parallel"),
            vmem_limit_bytes=vmem_limit,
        ),
    )(x2, scale_rows, shift_rows)

    return out2.reshape(N, C, H, W)


# --------------------------------------------------------------------------
# Reference + test
# --------------------------------------------------------------------------
def _abn_reference(x_nchw, gamma, beta):
    x = x_nchw.astype(jnp.float32)
    mean = jnp.mean(x, axis=(0, 2, 3), keepdims=True)
    var = jnp.mean((x - mean) ** 2, axis=(0, 2, 3), keepdims=True)
    y = (x - mean) / jnp.sqrt(var + BN_EPS)
    y = y * gamma.reshape(1, -1, 1, 1) + beta.reshape(1, -1, 1, 1)
    return jnp.where(y > 0, y, LEAKY_SLOPE * y).astype(x_nchw.dtype)


if __name__ == "__main__":
    key = jax.random.PRNGKey(0)

    # Primary small test (evenly tiled path).
    N, C, H, W = 2, 4, 16, 16
    k1, k2 = jax.random.split(key)
    x = jax.random.normal(k1, (N, C, H, W), dtype=jnp.float32) * 2.0 + 3.0
    gamma = jnp.linspace(0.5, 1.5, C, dtype=jnp.float32)
    beta = jnp.linspace(-0.2, 0.2, C, dtype=jnp.float32)

    out = jax.block_until_ready(abn_forward(x, gamma, beta))
    ref = _abn_reference(x, gamma, beta)
    assert out.shape == (N, C, H, W)
    assert jnp.allclose(out, ref, atol=1e-4, rtol=1e-4), float(
        jnp.max(jnp.abs(out - ref)))

    # Secondary small test: odd channels + HW not a multiple of 128
    # (exercises the lane-masked edge tile and full-dim row block).
    N2, C2, H2, W2 = 2, 3, 11, 13
    x2 = jax.random.normal(k2, (N2, C2, H2, W2), dtype=jnp.float32) * 0.7 - 1.5
    gamma2 = jnp.linspace(0.8, 1.2, C2, dtype=jnp.float32)
    beta2 = jnp.linspace(-0.1, 0.1, C2, dtype=jnp.float32)

    out2 = jax.block_until_ready(abn_forward(x2, gamma2, beta2))
    ref2 = _abn_reference(x2, gamma2, beta2)
    assert out2.shape == (N2, C2, H2, W2)
    assert jnp.allclose(out2, ref2, atol=1e-4, rtol=1e-4), float(
        jnp.max(jnp.abs(out2 - ref2)))

    print("KERNEL_OK")
</pallas_src>

<mosaic_0001>
module attributes {stable_mosaic.version = 11 : i64} {
  func.func @kernel(%arg0: i32, %arg1: i32, %arg2: memref<8x256xf32, #tpu.memory_space<vmem>>, %arg3: memref<8x1xf32, #tpu.memory_space<vmem>>, %arg4: memref<8x1xf32, #tpu.memory_space<vmem>>, %arg5: memref<8x1xf32, #tpu.memory_space<vmem>>) attributes {dimension_semantics = [#tpu.dimension_semantics<parallel>, #tpu.dimension_semantics<arbitrary>], iteration_bounds = array<i64: 1, 1>, scalar_prefetch = 0 : i64, scratch_operands = 0 : i64, tpu.core_type = #tpu.core_type<tc>, window_params = [{transform_indices = @transform_0, window_bounds = array<i64: 8, 256>}, {transform_indices = @transform_1, window_bounds = array<i64: 8, 1>}, {transform_indices = @transform_2, window_bounds = array<i64: 8, 1>}, {transform_indices = @transform_3, window_bounds = array<i64: 8, 1>}]} {
    %c0_i32 = arith.constant 0 : i32
    %0 = arith.cmpi eq, %arg1, %c0_i32 : i32
    %1 = arith.extui %0 : i1 to i32
    %c0_i32_0 = arith.constant 0 : i32
    %2 = arith.cmpi ne, %1, %c0_i32_0 : i32
    scf.if %2 {
      %cst_13 = arith.constant 0.000000e+00 : f32
      %18 = vector.broadcast %cst_13 : f32 to vector<8x1xf32>
      %c0_14 = arith.constant 0 : index
      %c0_15 = arith.constant 0 : index
      %19 = vector.load %arg4[%c0_14, %c0_15] : memref<8x1xf32, #tpu.memory_space<vmem>>, vector<8x1xf32>
      tpu.vector_store %arg4[%c0_14, %c0_15], %18 {strides = array<i32>} : memref<8x1xf32, #tpu.memory_space<vmem>>, vector<8x1xf32>,
      %cst_16 = arith.constant 0.000000e+00 : f32
      %20 = vector.broadcast %cst_16 : f32 to vector<8x1xf32>
      %c0_17 = arith.constant 0 : index
      %c0_18 = arith.constant 0 : index
      %21 = vector.load %arg5[%c0_17, %c0_18] : memref<8x1xf32, #tpu.memory_space<vmem>>, vector<8x1xf32>
      tpu.vector_store %arg5[%c0_17, %c0_18], %20 {strides = array<i32>} : memref<8x1xf32, #tpu.memory_space<vmem>>, vector<8x1xf32>,
    } else {
    }
    %c0 = arith.constant 0 : index
    %c0_1 = arith.constant 0 : index
    %3 = vector.load %arg2[%c0, %c0_1] : memref<8x256xf32, #tpu.memory_space<vmem>>, vector<8x256xf32>
    %c0_2 = arith.constant 0 : index
    %c0_3 = arith.constant 0 : index
    %4 = vector.load %arg3[%c0_2, %c0_3] : memref<8x1xf32, #tpu.memory_space<vmem>>, vector<8x1xf32>
    %5 = vector.broadcast %4 : vector<8x1xf32> to vector<8x256xf32>
    %6 = arith.subf %3, %5 : vector<8x256xf32>
    %c0_4 = arith.constant 0 : index
    %c0_5 = arith.constant 0 : index
    %7 = vector.load %arg4[%c0_4, %c0_5] : memref<8x1xf32, #tpu.memory_space<vmem>>, vector<8x1xf32>
    %cst = arith.constant dense<0.000000e+00> : vector<8xf32>
    %8 = vector.multi_reduction <add>, %6, %cst [1] : vector<8x256xf32> to vector<8xf32>
    %9 = vector.shape_cast %8 : vector<8xf32> to vector<8x1xf32>
    %10 = arith.addf %7, %9 : vector<8x1xf32>
    %c0_6 = arith.constant 0 : index
    %c0_7 = arith.constant 0 : index
    %11 = vector.load %arg4[%c0_6, %c0_7] : memref<8x1xf32, #tpu.memory_space<vmem>>, vector<8x1xf32>
    tpu.vector_store %arg4[%c0_6, %c0_7], %10 {strides = array<i32>} : memref<8x1xf32, #tpu.memory_space<vmem>>, vector<8x1xf32>,
    %c0_8 = arith.constant 0 : index
    %c0_9 = arith.constant 0 : index
    %12 = vector.load %arg5[%c0_8, %c0_9] : memref<8x1xf32, #tpu.memory_space<vmem>>, vector<8x1xf32>
    %13 = arith.mulf %6, %6 : vector<8x256xf32>
    %cst_10 = arith.constant dense<0.000000e+00> : vector<8xf32>
    %14 = vector.multi_reduction <add>, %13, %cst_10 [1] : vector<8x256xf32> to vector<8xf32>
    %15 = vector.shape_cast %14 : vector<8xf32> to vector<8x1xf32>
    %16 = arith.addf %12, %15 : vector<8x1xf32>
    %c0_11 = arith.constant 0 : index
    %c0_12 = arith.constant 0 : index
    %17 = vector.load %arg5[%c0_11, %c0_12] : memref<8x1xf32, #tpu.memory_space<vmem>>, vector<8x1xf32>
    tpu.vector_store %arg5[%c0_11, %c0_12], %16 {strides = array<i32>} : memref<8x1xf32, #tpu.memory_space<vmem>>, vector<8x1xf32>,
    return
  }
  func.func @transform_0(%arg0: i32, %arg1: i32) -> (i32, i32) {
    %c0_i32 = arith.constant 0 : i32
    return %arg0, %arg1 : i32, i32
  }
  func.func @transform_1(%arg0: i32, %arg1: i32) -> (i32, i32) {
    %c0_i32 = arith.constant 0 : i32
    %c0_i32_0 = arith.constant 0 : i32
    return %arg0, %c0_i32 : i32, i32
  }
  func.func @transform_2(%arg0: i32, %arg1: i32) -> (i32, i32) {
    %c0_i32 = arith.constant 0 : i32
    %c0_i32_0 = arith.constant 0 : i32
    return %arg0, %c0_i32 : i32, i32
  }
  func.func @transform_3(%arg0: i32, %arg1: i32) -> (i32, i32) {
    %c0_i32 = arith.constant 0 : i32
    %c0_i32_0 = arith.constant 0 : i32
    return %arg0, %c0_i32 : i32, i32
  }
}

</mosaic_0001>

<llo_original>
// kernel: tpu_custom_call.1
$region0: #{tpu_custom_call.1}
  #allocation0 [shape = 'u32[]', space=smem, size = 0x4, offset = 0x4, fixed_abs, tag = 'smem constant byte address 0x4 - core index']
  #allocation1 [shape = 'u32[144,128]{1,0:T(1,128)}', space=vmem, size = 0x12000, scoped, tag = 'internal scratch']
  %s0 = inlined_call_operand.hbm [shape: f32[8,256], index: 0, kind: input, shape index: {}]
  %s1 = inlined_call_operand.vmem [shape: f32[8,1], index: 1, kind: input, shape index: {}]
  %s2 = inlined_call_operand.vmem [shape: f32[8,1], index: 2, kind: output, shape index: {0}]
  %s3 = inlined_call_operand.vmem [shape: f32[8,1], index: 3, kind: output, shape index: {1}]
  %4 = xla_tuple %s2, %s3
  %s5 = sld [smem:[#allocation0]]
  $region34: #{tpu_custom_call.1} parent=0
    _
  %s7 = ssub.s32 1, %s5
  %s8 = scalar_select 0, %s7, %s5
  $region1: #{tpu_custom_call.1} parent=0
    #allocation2 [shape = 'u8[8192]{0}', space=vmem, size = 0x2000, scoped, tag = 'input window, operand 0, single buffered']
    #allocation3 [shape = 's32[1]{0}', space=sflag, size = 0x4, scoped, tag = 'scoped memory for tpu_custom_call.1']
    %9 = vsyncpa [#allocation3], 0
    // Predicated region
    $region2: #{tpu_custom_call.1} parent=1 // pred_check
      _
    $region3: #{tpu_custom_call.1} parent=1 // pred_check_branch
      %11 = sbr.rel (0) target = $region5
    $region4: #{tpu_custom_call.1} parent=1 // pred_region
      %s13 = ssub.s32 256, 256
      %14 = vsyncadd [#allocation3], %s13
      %s16 = sshll.u32 [#allocation2], 4
      %s17 = int_to_ptr.vmem [resolvable:$true] %s16
      %19 = dma.hbm_to_vmem [thread:$0]  %s0, 256, %s17, [#allocation3]
    $region5: #{tpu_custom_call.1} parent=1 // pred_fallthru
      _
    // Predicated region
    $region6: #{tpu_custom_call.1} parent=1 // pred_check
      _
    $region7: #{tpu_custom_call.1} parent=1 // pred_check_branch
      %21 = sbr.rel (0) target = $region9
    $region8: #{tpu_custom_call.1} parent=1 // pred_region
      _
    $region9: #{tpu_custom_call.1} parent=1 // pred_fallthru
      _
    // Predicated region
    $region10: #{tpu_custom_call.1} parent=1 // pred_check
      _
    $region11: #{tpu_custom_call.1} parent=1 // pred_check_branch
      %23 = sbr.rel (0) target = $region13
    $region12: #{tpu_custom_call.1} parent=1 // pred_region
      %24 = dma.done [#allocation3], 256
    $region13: #{tpu_custom_call.1} parent=1 // pred_fallthru
      _
    %p25 = scmp.eq.s32.totalorder 0, 0
    // Predicated region
    $region14: #{tpu_custom_call.1} parent=1 // pred_check
      %p26 = pneg %p25
    $region15: #{tpu_custom_call.1} parent=1 // pred_check_branch
      %28 = sbr.rel (%p26) target = $region17
    $region16: #{tpu_custom_call.1} parent=1 // pred_region
      %vm29 = vcmask 7168
      %30 = vst.msk [vmem:[%s2] sm:$0xff] %vm29, 0.0
      %31 = vst.msk [vmem:[%s3] sm:$0xff] %vm29, 0.0
    $region17: #{tpu_custom_call.1} parent=1 // pred_fallthru
      _
    %v32 = vld [vmem:[#allocation2] sm:$0xff]
    %v33 = vld [vmem:[#allocation2 + $0x8] sm:$0xff]
    %v34 = vld [vmem:[%s1] sm:$0xff]
    %36 = vset.pattern.permute.xlu0 0
    %37 = vperm.xlu0 %36, %v34
    %v38 = vpop.permute.xlu0 %37
    %v40 = vsub.f32 %v32, %v38
    %v41 = vsub.f32 %v33, %v38
    %v42 = vld [vmem:[%s2] sm:$0xff]
    %v43 = vadd.f32 %v40, %v41
    %44 = vadd.xlane.f32.xlu0 %v43
    %v45 = vpop.xlane.xlu0 %44
    %v46 = vadd.f32 %v42, %v45
    %vm47 = vcmask 7168
    %48 = vst.msk [vmem:[%s2] sm:$0xff] %vm47, %v46
    %v49 = vld [vmem:[%s3] sm:$0xff]
    %v50 = vmul.f32 %v40, %v40
    %v51 = vmul.f32 %v41, %v41
    %v52 = vadd.f32 %v50, %v51
    %53 = vadd.xlane.f32.xlu0 %v52
    %v54 = vpop.xlane.xlu0 %53
    %v55 = vadd.f32 %v49, %v54
    %56 = vst.msk [vmem:[%s3] sm:$0xff] %vm47, %v55
    // Predicated region
    $region18: #{tpu_custom_call.1} parent=1 // pred_check
      _
    $region19: #{tpu_custom_call.1} parent=1 // pred_check_branch
      %58 = sbr.rel (0) target = $region21
    $region20: #{tpu_custom_call.1} parent=1 // pred_region
      _
    $region21: #{tpu_custom_call.1} parent=1 // pred_fallthru
      _
    // Predicated region
    $region22: #{tpu_custom_call.1} parent=1 // pred_check
      _
    $region23: #{tpu_custom_call.1} parent=1 // pred_check_branch
      %60 = sbr.rel (0) target = $region25
    $region24: #{tpu_custom_call.1} parent=1 // pred_region
      _
    $region25: #{tpu_custom_call.1} parent=1 // pred_fallthru
      _
    // Predicated region
    $region26: #{tpu_custom_call.1} parent=1 // pred_check
      _
    $region27: #{tpu_custom_call.1} parent=1 // pred_check_branch
      %62 = sbr.rel (0) target = $region29
    $region28: #{tpu_custom_call.1} parent=1 // pred_region
      _
    $region29: #{tpu_custom_call.1} parent=1 // pred_fallthru
      _
    // Predicated region
    $region30: #{tpu_custom_call.1} parent=1 // pred_check
      _
    $region31: #{tpu_custom_call.1} parent=1 // pred_check_branch
      %64 = sbr.rel (0) target = $region33
    $region32: #{tpu_custom_call.1} parent=1 // pred_region
      _
    $region33: #{tpu_custom_call.1} parent=1 // pred_fallthru
      _
    %65 = vsyncpa [#allocation3], 1

</llo_original>
